<compile_context>
chip_gen: v6e
topology: v6e:2x2x1
jax: 0.10.0
libtpu: 0.0.40
codegen_flags: <defaults>
</compile_context>

<pallas_src>
import jax
import jax.numpy as jnp
from jax.experimental import pallas as pl
from jax.experimental.pallas import tpu as pltpu


# --------------------------------------------------------------------------- #
# Kernels
# --------------------------------------------------------------------------- #
def _linear_direct_kernel(h_ref, w_ref, b_ref, o_ref):
    """Whole contraction in one block: no scratch accumulator needed."""
    acc = jnp.dot(h_ref[...], w_ref[...], preferred_element_type=jnp.float32)
    o_ref[...] = (acc + b_ref[...]).astype(o_ref.dtype)


def _linear_acc_kernel(h_ref, w_ref, b_ref, o_ref, acc_ref):
    """K (h_dim) is the innermost grid axis; accumulate in f32 VMEM scratch."""
    k = pl.program_id(2)

    @pl.when(k == 0)
    def _init():
        acc_ref[...] = jnp.zeros_like(acc_ref)

    acc_ref[...] += jnp.dot(h_ref[...], w_ref[...],
                            preferred_element_type=jnp.float32)

    @pl.when(k == pl.num_programs(2) - 1)
    def _finalize():
        o_ref[...] = (acc_ref[...] + b_ref[...]).astype(o_ref.dtype)


# --------------------------------------------------------------------------- #
# Tiling helpers
# --------------------------------------------------------------------------- #
def _round_up(x, m):
    return ((x + m - 1) // m) * m


def _largest_dividing_tile(dim, cap, align):
    """Largest multiple of `align` that divides `dim` and is <= cap; 0 if none."""
    t = (min(cap, dim) // align) * align
    while t >= align:
        if dim % t == 0:
            return t
        t -= align
    return 0


def _pick_tile(dim, cap, align):
    """Tile for one dim: full dim if small; else prefer a dividing, aligned
    tile; else an aligned tile (the dim will be zero-padded up to a multiple)."""
    if dim <= cap:
        return dim
    t = _largest_dividing_tile(dim, cap, align)
    if t >= max(align, cap // 2):
        return t
    return max(align, (cap // align) * align)


def _default_vmem_budget():
    """~3/4 of this generation's VMEM (v7x: ~48 MiB of 64; v5e/v6e: ~96 of 128),
    leaving headroom for compiler-internal scratch / semaphores."""
    cap = None
    try:
        info = pltpu.get_tpu_info()
        cap = getattr(info, "vmem_capacity_bytes", None)
    except Exception:
        cap = None
    if not cap:
        cap = 64 << 20  # conservative fallback (v7x)
    return max(16 << 20, (int(cap) * 3) // 4)


def _choose_tiles(B, H, D, h_b, w_b, o_b, budget):
    """Pick (tb, tk, tn).

    Order of priorities (perf review): tk first (full K removes the f32
    accumulator RMW and h re-fetch), then tb covering all of B (weight is
    streamed once), then tn to fill the VMEM budget.  Shrink tn -> tk -> tb
    when over budget.  Keep >= 2 grid points on the parallel axes when
    possible so both v7x TensorCores get work.
    """
    tk = _pick_tile(H, 4096, 128)
    tb = _pick_tile(B, 1024, 8)
    tn = _pick_tile(D, 2048, 128)

    # If the whole batch is one tile, split N so >= 2 parallel grid points.
    if tb >= B and D >= 256 and tn > 128:
        half_cap = max(128, ((D // 2) // 128) * 128)
        t = _largest_dividing_tile(D, half_cap, 128)
        tn = min(tn, t if t else half_cap)

    def vmem_bytes(tb_, tk_, tn_):
        acc = tb_ * tn_ * 4 if tk_ < H else 0  # scratch only on multi-K grids
        return (2 * tb_ * tk_ * h_b      # h block, double-buffered
                + 2 * tk_ * tn_ * w_b    # weight block, double-buffered
                + 2 * tn_ * 4            # bias block (f32)
                + 2 * tb_ * tn_ * o_b    # output block, double-buffered
                + acc)

    while vmem_bytes(tb, tk, tn) > budget:
        if tn > 128:
            tn = max(128, ((tn // 2) // 128) * 128)
        elif tk > 128:
            tk = max(128, ((tk // 2) // 128) * 128)
        elif tb > 8:
            tb = max(8, ((tb // 2) // 8) * 8)
        else:
            break
    return tb, tk, tn


# --------------------------------------------------------------------------- #
# Forward
# --------------------------------------------------------------------------- #
def lib_decoder_forward(h, weight, bias, *, tb=None, tk=None, tn=None,
                        out_dtype=None, vmem_budget_bytes=None):
    """LIB_Decoder forward: h [B, h_dim] @ weight [h_dim, d_dim] + bias [d_dim].

    No dtype casting is performed here: params are streamed in their stored
    dtype.  Store the weight in bf16 (cast once at init) to halve its HBM
    traffic; results are always accumulated in f32.
    """
    B, H = h.shape
    Kw, D = weight.shape
    assert Kw == H, "weight must be [h_dim, d_dim]"
    assert bias.shape == (D,)
    if out_dtype is None:
        out_dtype = h.dtype

    h_b = jnp.dtype(h.dtype).itemsize
    w_b = jnp.dtype(weight.dtype).itemsize
    o_b = jnp.dtype(out_dtype).itemsize

    if vmem_budget_bytes is None:
        vmem_budget_bytes = _default_vmem_budget()

    a_tb, a_tk, a_tn = _choose_tiles(B, H, D, h_b, w_b, o_b, vmem_budget_bytes)
    tb = a_tb if tb is None else tb
    tk = a_tk if tk is None else tk
    tn = a_tn if tn is None else tn

    # A tile smaller than its (padded) dim must be hardware-aligned.
    assert tb == B or tb % 8 == 0, "tb must be a multiple of 8 or == B"
    assert tk == H or tk % 128 == 0, "tk must be a multiple of 128 or == h_dim"
    assert tn == D or tn % 128 == 0, "tn must be a multiple of 128 or == d_dim"

    # Zero-pad awkward dims up to a multiple of the tile (mathematically inert:
    # padded h columns / weight rows are zero; padded outputs are sliced off).
    B_p = _round_up(B, tb)
    H_p = _round_up(H, tk)
    D_p = _round_up(D, tn)

    hp = h if (B_p == B and H_p == H) else jnp.pad(
        h, ((0, B_p - B), (0, H_p - H)))
    wp = weight if (H_p == H and D_p == D) else jnp.pad(
        weight, ((0, H_p - H), (0, D_p - D)))
    bp = bias if D_p == D else jnp.pad(bias, (0, D_p - D))
    bias2d = bp.reshape(1, D_p).astype(jnp.float32)

    gb, gn, gk = B_p // tb, D_p // tn, H_p // tk

    cost = pl.CostEstimate(
        flops=2 * B_p * H_p * D_p,
        transcendentals=0,
        bytes_accessed=(B_p * H_p * h_b          # activations
                        + gb * H_p * D_p * w_b   # weight (re-streamed gb times)
                        + D_p * 4                # bias
                        + B_p * D_p * o_b),      # output
    )
    out_shape = jax.ShapeDtypeStruct((B_p, D_p), out_dtype)
    vmem_limit = int(vmem_budget_bytes)

    if gk == 1:
        # Whole contraction in one block: scratch-free kernel, 2-D grid.
        out = pl.pallas_call(
            _linear_direct_kernel,
            out_shape=out_shape,
            grid_spec=pltpu.PrefetchScalarGridSpec(
                num_scalar_prefetch=0,
                grid=(gb, gn),
                in_specs=[
                    pl.BlockSpec((tb, H_p), lambda i, j: (i, 0)),   # h
                    pl.BlockSpec((H_p, tn), lambda i, j: (0, j)),   # weight
                    pl.BlockSpec((1, tn), lambda i, j: (0, j)),     # bias
                ],
                out_specs=pl.BlockSpec((tb, tn), lambda i, j: (i, j)),
            ),
            compiler_params=pltpu.CompilerParams(
                dimension_semantics=("parallel", "parallel"),
                vmem_limit_bytes=vmem_limit,
            ),
            cost_estimate=cost,
        )(hp, wp, bias2d)
    else:
        # K-innermost accumulator matmul.
        out = pl.pallas_call(
            _linear_acc_kernel,
            out_shape=out_shape,
            grid_spec=pltpu.PrefetchScalarGridSpec(
                num_scalar_prefetch=0,
                grid=(gb, gn, gk),
                in_specs=[
                    pl.BlockSpec((tb, tk), lambda i, j, k: (i, k)),   # h
                    pl.BlockSpec((tk, tn), lambda i, j, k: (k, j)),   # weight
                    pl.BlockSpec((1, tn), lambda i, j, k: (0, j)),    # bias
                ],
                out_specs=pl.BlockSpec((tb, tn), lambda i, j, k: (i, j)),
                scratch_shapes=[pltpu.VMEM((tb, tn), jnp.float32)],
            ),
            compiler_params=pltpu.CompilerParams(
                dimension_semantics=("parallel", "parallel", "arbitrary"),
                vmem_limit_bytes=vmem_limit,
            ),
            cost_estimate=cost,
        )(hp, wp, bias2d)

    if B_p != B or D_p != D:
        out = out[:B, :D]
    return out


def init_lib_decoder_params(key, h_dim, d_dim, dtype=jnp.float32):
    """PyTorch-style nn.Linear init (uniform +-1/sqrt(h_dim)); cast ONCE here
    (outside the forward hot path) if bf16 streaming is wanted."""
    kw, kb = jax.random.split(key)
    bound = 1.0 / (h_dim ** 0.5)
    weight = jax.random.uniform(kw, (h_dim, d_dim), jnp.float32, -bound, bound)
    bias = jax.random.uniform(kb, (d_dim,), jnp.float32, -bound, bound)
    return weight.astype(dtype), bias.astype(dtype)


# --------------------------------------------------------------------------- #
# Tests
# --------------------------------------------------------------------------- #
if __name__ == "__main__":
    key = jax.random.PRNGKey(0)

    # --- Test 1: f32 params, small shapes implied by the module.  Single
    #     block -> the scratch-free direct kernel path. ---
    B, H, D = 8, 32, 128
    k_h, k_p, key = jax.random.split(key, 3)
    h = jax.random.normal(k_h, (B, H), dtype=jnp.float32)
    weight, bias = init_lib_decoder_params(k_p, H, D, dtype=jnp.float32)

    out = jax.block_until_ready(lib_decoder_forward(h, weight, bias))
    ref = h @ weight + bias
    assert out.shape == ref.shape
    assert jnp.allclose(out, ref, atol=2e-2, rtol=2e-2), "mismatch (f32 path)"

    # --- Test 2: bf16 params created once at init (no per-call cast), small
    #     explicit tiles so the K-accumulator, N-streaming and zero-padding
    #     paths are all exercised (24->32 rows, 320->384 K). ---
    B2, H2, D2 = 24, 320, 384
    k_h2, k_p2 = jax.random.split(key)
    h2 = jax.random.normal(k_h2, (B2, H2), dtype=jnp.float32).astype(jnp.bfloat16)
    weight2, bias2 = init_lib_decoder_params(k_p2, H2, D2, dtype=jnp.bfloat16)

    out2 = jax.block_until_ready(
        lib_decoder_forward(h2, weight2, bias2, tb=16, tk=128, tn=128))
    ref2 = (h2.astype(jnp.float32) @ weight2.astype(jnp.float32)
            + bias2.astype(jnp.float32))
    assert out2.shape == ref2.shape
    assert jnp.allclose(out2.astype(jnp.float32), ref2, atol=3e-2, rtol=3e-2), \
        "mismatch (bf16 path)"

    print("KERNEL_OK")
</pallas_src>

<mosaic_0001>
module attributes {stable_mosaic.version = 11 : i64} {
  func.func @_linear_direct_kernel(%arg0: i32, %arg1: i32, %arg2: memref<8x32xf32, #tpu.memory_space<vmem>>, %arg3: memref<32x128xf32, #tpu.memory_space<vmem>>, %arg4: memref<1x128xf32, #tpu.memory_space<vmem>>, %arg5: memref<8x128xf32, #tpu.memory_space<vmem>>) attributes {dimension_semantics = [#tpu.dimension_semantics<parallel>, #tpu.dimension_semantics<parallel>], iteration_bounds = array<i64: 1, 1>, scalar_prefetch = 0 : i64, scratch_operands = 0 : i64, tpu.core_type = #tpu.core_type<tc>, window_params = [{transform_indices = @transform_0, window_bounds = array<i64: 8, 32>}, {transform_indices = @transform_1, window_bounds = array<i64: 32, 128>}, {transform_indices = @transform_2, window_bounds = array<i64: 1, 128>}, {transform_indices = @transform_3, window_bounds = array<i64: 8, 128>}]} {
    %c0 = arith.constant 0 : index
    %c0_0 = arith.constant 0 : index
    %0 = vector.load %arg2[%c0, %c0_0] : memref<8x32xf32, #tpu.memory_space<vmem>>, vector<8x32xf32>
    %c0_1 = arith.constant 0 : index
    %c0_2 = arith.constant 0 : index
    %1 = vector.load %arg3[%c0_1, %c0_2] : memref<32x128xf32, #tpu.memory_space<vmem>>, vector<32x128xf32>
    %cst = arith.constant dense<0.000000e+00> : vector<8x128xf32>
    %2 = tpu.matmul %0, %1, %cst {dimension_numbers = #tpu.dot_dimension_numbers<[1], [0], [0], [1], [0, 0, 1, 1], [], []>} : vector<8x32xf32>, vector<32x128xf32>, vector<8x128xf32> -> vector<8x128xf32>
    %c0_3 = arith.constant 0 : index
    %c0_4 = arith.constant 0 : index
    %3 = vector.load %arg4[%c0_3, %c0_4] : memref<1x128xf32, #tpu.memory_space<vmem>>, vector<1x128xf32>
    %4 = vector.broadcast %3 : vector<1x128xf32> to vector<8x128xf32>
    %5 = arith.addf %2, %4 : vector<8x128xf32>
    %c0_5 = arith.constant 0 : index
    %c0_6 = arith.constant 0 : index
    %6 = vector.load %arg5[%c0_5, %c0_6] : memref<8x128xf32, #tpu.memory_space<vmem>>, vector<8x128xf32>
    tpu.vector_store %arg5[%c0_5, %c0_6], %5 {strides = array<i32>} : memref<8x128xf32, #tpu.memory_space<vmem>>, vector<8x128xf32>,
    return
  }
  func.func @transform_0(%arg0: i32, %arg1: i32) -> (i32, i32) {
    %c0_i32 = arith.constant 0 : i32
    %c0_i32_0 = arith.constant 0 : i32
    return %arg0, %c0_i32 : i32, i32
  }
  func.func @transform_1(%arg0: i32, %arg1: i32) -> (i32, i32) {
    %c0_i32 = arith.constant 0 : i32
    %c0_i32_0 = arith.constant 0 : i32
    return %c0_i32, %arg1 : i32, i32
  }
  func.func @transform_2(%arg0: i32, %arg1: i32) -> (i32, i32) {
    %c0_i32 = arith.constant 0 : i32
    %c0_i32_0 = arith.constant 0 : i32
    return %c0_i32, %arg1 : i32, i32
  }
  func.func @transform_3(%arg0: i32, %arg1: i32) -> (i32, i32) {
    %c0_i32 = arith.constant 0 : i32
    return %arg0, %arg1 : i32, i32
  }
}

</mosaic_0001>

<llo_original>
// kernel: tpu_custom_call.1
$region0: #{tpu_custom_call.1}
  #allocation0 [shape = 'u32[]', space=smem, size = 0x4, offset = 0x4, fixed_abs, tag = 'smem constant byte address 0x4 - core index']
  #allocation1 [shape = 'u32[144,128]{1,0:T(1,128)}', space=vmem, size = 0x12000, scoped, tag = 'internal scratch']
  %s0 = inlined_call_operand.hbm [shape: f32[8,32], index: 0, kind: input, shape index: {}]
  %s1 = inlined_call_operand.hbm [shape: f32[32,128], index: 1, kind: input, shape index: {}]
  %s2 = inlined_call_operand.vmem [shape: f32[1,128], index: 2, kind: input, shape index: {}]
  %s3 = inlined_call_operand.hbm [shape: f32[8,128], index: 3, kind: output, shape index: {}]
  %s4 = sld [smem:[#allocation0]]
  $region30: #{tpu_custom_call.1} parent=0
    _
  %s6 = ssub.s32 1, %s4
  %s7 = scalar_select 0, %s6, %s4
  $region1: #{tpu_custom_call.1} parent=0
    #allocation2 [shape = 'u8[4096]{0}', space=vmem, size = 0x1000, scoped, tag = 'input window, operand 0, single buffered']
    #allocation3 [shape = 's32[1]{0}', space=sflag, size = 0x4, scoped, tag = 'scoped memory for tpu_custom_call.1']
    #allocation4 [shape = 's32[1]{0}', space=sflag, size = 0x4, scoped, tag = 'scoped memory for tpu_custom_call.1']
    #allocation5 [shape = 'u8[16384]{0}', space=vmem, size = 0x4000, scoped, tag = 'input window, operand 1, single buffered']
    #allocation6 [shape = 's32[1]{0}', space=sflag, size = 0x4, scoped, tag = 'scoped memory for tpu_custom_call.1']
    #allocation7 [shape = 'u8[4096]{0}', space=vmem, size = 0x1000, scoped, tag = 'output window, operand 0, single buffered']
    %8 = vsyncpa [#allocation3], 0
    %9 = vsyncpa [#allocation6], 0
    %10 = vsyncpa [#allocation4], 0
    // Predicated region
    $region2: #{tpu_custom_call.1} parent=1 // pred_check
      _
    $region3: #{tpu_custom_call.1} parent=1 // pred_check_branch
      %12 = sbr.rel (0) target = $region5
    $region4: #{tpu_custom_call.1} parent=1 // pred_region
      %s14 = ssub.s32 128, 128
      %15 = vsyncadd [#allocation3], %s14
      %s17 = sshll.u32 [#allocation2], 4
      %s18 = int_to_ptr.vmem [resolvable:$true] %s17
      %20 = dma.hbm_to_vmem [thread:$0]  %s0, 128, %s18, [#allocation3]
    $region5: #{tpu_custom_call.1} parent=1 // pred_fallthru
      _
    // Predicated region
    $region6: #{tpu_custom_call.1} parent=1 // pred_check
      _
    $region7: #{tpu_custom_call.1} parent=1 // pred_check_branch
      %22 = sbr.rel (0) target = $region9
    $region8: #{tpu_custom_call.1} parent=1 // pred_region
      %s24 = ssub.s32 512, 512
      %25 = vsyncadd [#allocation6], %s24
      %s26 = sshll.u32 [#allocation5], 4
      %s27 = int_to_ptr.vmem [resolvable:$true] %s26
      %32 = dma.hbm_to_vmem [thread:$0]  %s1, 512, %s27, [#allocation6], 128, 128, 8
    $region9: #{tpu_custom_call.1} parent=1 // pred_fallthru
      _
    // Predicated region
    $region10: #{tpu_custom_call.1} parent=1 // pred_check
      _
    $region11: #{tpu_custom_call.1} parent=1 // pred_check_branch
      %34 = sbr.rel (0) target = $region13
    $region12: #{tpu_custom_call.1} parent=1 // pred_region
      _
    $region13: #{tpu_custom_call.1} parent=1 // pred_fallthru
      _
    // Predicated region
    $region14: #{tpu_custom_call.1} parent=1 // pred_check
      _
    $region15: #{tpu_custom_call.1} parent=1 // pred_check_branch
      %36 = sbr.rel (0) target = $region17
    $region16: #{tpu_custom_call.1} parent=1 // pred_region
      %37 = dma.done [#allocation3], 128
    $region17: #{tpu_custom_call.1} parent=1 // pred_fallthru
      _
    // Predicated region
    $region18: #{tpu_custom_call.1} parent=1 // pred_check
      _
    $region19: #{tpu_custom_call.1} parent=1 // pred_check_branch
      %39 = sbr.rel (0) target = $region21
    $region20: #{tpu_custom_call.1} parent=1 // pred_region
      %40 = dma.done [#allocation6], 512
    $region21: #{tpu_custom_call.1} parent=1 // pred_fallthru
      _
    %v41 = vld [vmem:[#allocation2] sm:$0xff]
    %v42 = vld [vmem:[#allocation5] sm:$0xff]
    %v43 = vld [vmem:[#allocation5 + $0x8] sm:$0xff]
    %v44 = vld [vmem:[#allocation5 + $0x10] sm:$0xff]
    %v45 = vld [vmem:[#allocation5 + $0x18] sm:$0xff]
    %v46 = vld [vmem:[%s2] sm:$0x1]
    %v48 = vlaneseq
    %v49 = vshrl.u32 %v48, 7
    %v50 = vsub.s32 0, %v49
    %v51 = vrot.slane %v46, %v50
    %vm53 = vcmask 261120
    %v55 = vsel %vm53, %v41, 0
    %57 = vmatprep.subr.mxu0 0.0
    %58 = vmatpush1.msra.mxu0 0.0
    %59 = vmatprep.subr.mxu0 0.0
    %60 = vmatpush1.msra.mxu0 0.0
    %61 = vmatprep.subr.mxu0 0.0
    %62 = vmatpush1.msra.mxu0 0.0
    %63 = vmatprep.subr.mxu0 0.0
    %64 = vmatpush1.msra.mxu0 0.0
    %65 = vmatprep.subr.mxu0 0.0
    %66 = vmatpush1.msra.mxu0 0.0
    %67 = vmatprep.subr.mxu0 0.0
    %68 = vmatpush1.msra.mxu0 0.0
    %69 = vmatprep.subr.mxu0 0.0
    %70 = vmatpush1.msra.mxu0 0.0
    %71 = vmatprep.subr.mxu0 0.0
    %72 = vmatpush1.msra.mxu0 0.0
    %73 = vmatprep.subr.mxu0 0.0
    %74 = vmatpush1.msra.mxu0 0.0
    %75 = vmatprep.subr.mxu0 0.0
    %76 = vmatpush1.msra.mxu0 0.0
    %77 = vmatprep.subr.mxu0 0.0
    %78 = vmatpush1.msra.mxu0 0.0
    %79 = vmatprep.subr.mxu0 0.0
    %80 = vmatpush1.msra.mxu0 0.0
    %81 = vmatprep.subr.mxu0 0.0
    %82 = vmatpush1.msra.mxu0 %v45
    %83 = vmatprep.subr.mxu0 0.0
    %84 = vmatpush1.msra.mxu0 %v44
    %85 = vmatprep.subr.mxu0 0.0
    %86 = vmatpush1.msra.mxu0 %v43
    %87 = vmatprep.subr.mxu0 0.0
    %88 = vmatpush1.msra.mxu0 %v42
    %89 = vmatprep.subr.mxu0 0.0
    %90 = vmatpush2.msra.mxu0 0.0
    %91 = vmatprep.subr.mxu0 0.0
    %92 = vmatpush2.msra.mxu0 0.0
    %93 = vmatprep.subr.mxu0 0.0
    %94 = vmatpush2.msra.mxu0 0.0
    %95 = vmatprep.subr.mxu0 0.0
    %96 = vmatpush2.msra.mxu0 0.0
    %97 = vmatprep.subr.mxu0 0.0
    %98 = vmatpush2.msra.mxu0 0.0
    %99 = vmatprep.subr.mxu0 0.0
    %100 = vmatpush2.msra.mxu0 0.0
    %101 = vmatprep.subr.mxu0 0.0
    %102 = vmatpush2.msra.mxu0 0.0
    %103 = vmatprep.subr.mxu0 0.0
    %104 = vmatpush2.msra.mxu0 0.0
    %105 = vmatprep.subr.mxu0 0.0
    %106 = vmatpush2.msra.mxu0 0.0
    %107 = vmatprep.subr.mxu0 0.0
    %108 = vmatpush2.msra.mxu0 0.0
    %109 = vmatprep.subr.mxu0 0.0
    %110 = vmatpush2.msra.mxu0 0.0
    %111 = vmatprep.subr.mxu0 0.0
    %112 = vmatpush2.msra.mxu0 0.0
    %113 = vmatprep.subr.mxu0 0.0
    %114 = vmatpush2.msra.mxu0 0.0
    %115 = vmatprep.subr.mxu0 0.0
    %116 = vmatpush2.msra.mxu0 0.0
    %117 = vmatprep.subr.mxu0 0.0
    %118 = vmatpush2.msra.mxu0 0.0
    %119 = vmatprep.subr.mxu0 0.0
    %120 = vmatpush2.msra.mxu0 0.0
    %121 = vmatprep.mubr.f32.mxu0 0.0
    %122 = vmatmul.mubr.f32.gmra.mxu0 %v55
    %v123 = vpop.f32.mrf.mxu0
    %v124 = vadd.f32 %v51, %v123
    %v125 = vpop.f32.mrf.mxu0
    %126 = vdwg.mxu0
    %127 = vst [vmem:[#allocation7] sm:$0xff] %v124
    // Predicated region
    $region22: #{tpu_custom_call.1} parent=1 // pred_check
      _
    $region23: #{tpu_custom_call.1} parent=1 // pred_check_branch
      %129 = sbr.rel (0) target = $region25
    $region24: #{tpu_custom_call.1} parent=1 // pred_region
      %s131 = ssub.s32 128, 128
      %132 = vsyncadd [#allocation4], %s131
      %s134 = sshll.u32 [#allocation7], 4
      %s135 = int_to_ptr.vmem [resolvable:$true] %s134
      %137 = dma.vmem_to_hbm [thread:$0]  %s135, 128, %s3, [#allocation4]
    $region25: #{tpu_custom_call.1} parent=1 // pred_fallthru
      _
    // Predicated region
    $region26: #{tpu_custom_call.1} parent=1 // pred_check
      _
    $region27: #{tpu_custom_call.1} parent=1 // pred_check_branch
      %139 = sbr.rel (0) target = $region29
    $region28: #{tpu_custom_call.1} parent=1 // pred_region
      %140 = dma.done [#allocation4], 128
    $region29: #{tpu_custom_call.1} parent=1 // pred_fallthru
      _
    %141 = vsyncpa [#allocation3], 1
    %142 = vsyncpa [#allocation6], 1
    %143 = vsyncpa [#allocation4], 1

</llo_original>
